<compile_context>
chip_gen: v7x
topology: tpu7x:2x2x1
jax: 0.10.0
libtpu: 0.0.40
codegen_flags: <defaults>
</compile_context>

<pallas_src>
import numpy as np
import jax
import jax.numpy as jnp
from jax import lax
from jax.experimental import pallas as pl
from jax.experimental.pallas import tpu as pltpu

W_BIT = 8
_QLEVELS = float(2 ** W_BIT - 1)
_BN_EPS = 1e-5


# ----------------------------- quantization helpers -------------------------

def act_quant(x):
    # DoReFa activation quantization (k = W_BIT): clamp to [0,1], uniform quantize.
    return jnp.round(jnp.clip(x, 0.0, 1.0) * _QLEVELS) * (1.0 / _QLEVELS)


def quantize_weight(w, k=W_BIT):
    # DoReFa weight quantization (k = W_BIT); done once at parameter setup (glue).
    n = float(2 ** k - 1)
    t = jnp.tanh(w)
    t = t / (2.0 * jnp.max(jnp.abs(t))) + 0.5
    return 2.0 * (jnp.round(t * n) / n) - 1.0


# ----------------------------- Pallas kernel --------------------------------

def convbnprelu_kernel(x_ref, p_ref, o_ref):
    """Fused 1x1 quantized conv (MXU) + folded BN + 8-bit act-quant.

    x_ref: (1, Cin,  HW_TILE)   input tile, channels on sublanes, H*W on lanes
    p_ref: (Cout, Cin + 1)      packed [255*bn_scale*w_q | 255*bn_bias]
    o_ref: (1, Cout, HW_TILE)   output tile
    """
    cin = x_ref.shape[1]

    x = x_ref[0].astype(jnp.float32)            # (Cin, HW_T)
    p = p_ref[...].astype(jnp.float32)          # (Cout, Cin + 1)
    w = p[:, :cin]                              # (Cout, Cin)  = 255*bn_scale*w_q
    b = p[:, cin:cin + 1]                       # (Cout, 1)    = 255*bn_bias

    # 1x1 conv on the MXU (vector-extended slot); VALU only sees the epilogue.
    acc = jnp.dot(w, x, preferred_element_type=jnp.float32,
                  precision=lax.Precision.HIGHEST)          # (Cout, HW_T)

    # BN scale and the x255 quantizer scale are pre-folded into w/b, so the
    # epilogue round(clip(acc + b, 0, 255)) / 255 == act_quant(bn(conv(x))).
    y = jnp.round(jnp.clip(acc + b, 0.0, _QLEVELS)) * (1.0 / _QLEVELS)
    o_ref[0] = y.astype(o_ref.dtype)


# ----------------------------- tiling --------------------------------------

def _ceil_div(a, b):
    return -(-a // b)


def _round_up(a, m):
    return _ceil_div(a, m) * m


def _choose_tiling(hw, n, cin, cout, budget_bytes=8 << 20):
    """Pick the lane tile (multiple of 128) and the padded HW extent.

    Double-buffered per-program footprint ~ 2*(cin+cout)*tile*4 B is kept
    under `budget_bytes`, which fits the scoped-VMEM default on every
    generation (v5e/v6e/v7x) without needing vmem_limit_bytes overrides.
    """
    cap = (budget_bytes // (2 * (cin + cout) * 4)) // 128 * 128
    cap = int(max(128, min(cap, 16384)))
    hw128 = _round_up(hw, 128)
    ntiles = _ceil_div(hw128, cap)
    if n == 1 and ntiles < 2 and hw128 >= 256:
        # v7x shards the "parallel" grid axes over 2 TensorCores: when the
        # batch axis can't provide parallelism, keep >= 2 lane tiles.
        ntiles = 2
    tile = _round_up(_ceil_div(hw128, ntiles), 128)
    hw_pad = ntiles * tile
    return tile, hw_pad


# ----------------------------- wrapper --------------------------------------

def conv_bn_prelu(x_nchw, params):
    """ConvBnPrelu forward. x_nchw: (N, Cin, H, W); params: (Cout, Cin+1)."""
    N, Cin, H, W = x_nchw.shape
    Cout = params.shape[0]
    HW = H * W

    hw_tile, hw_pad = _choose_tiling(HW, N, Cin, Cout)

    # Free contiguous reshape: lane axis becomes H*W (lane-dense, no transpose).
    x3 = x_nchw.reshape(N, Cin, HW)
    if hw_pad != HW:
        # Pad to a multiple of the lane tile: keeps stores unmasked (vst, not
        # vst.msk); padded columns are computed and sliced off afterwards.
        x3 = jnp.pad(x3, ((0, 0), (0, 0), (0, hw_pad - HW)))

    grid = (N, hw_pad // hw_tile)

    flops = 2 * N * hw_pad * Cin * Cout + 4 * N * hw_pad * Cout
    bytes_accessed = 4 * N * hw_pad * (Cin + Cout) + 4 * int(params.size)

    out3 = pl.pallas_call(
        convbnprelu_kernel,
        out_shape=jax.ShapeDtypeStruct((N, Cout, hw_pad), x_nchw.dtype),
        grid=grid,
        in_specs=[
            pl.BlockSpec((1, Cin, hw_tile), lambda n, t: (n, 0, t)),
            pl.BlockSpec((Cout, Cin + 1), lambda n, t: (0, 0)),
        ],
        out_specs=pl.BlockSpec((1, Cout, hw_tile), lambda n, t: (n, 0, t)),
        compiler_params=pltpu.CompilerParams(
            dimension_semantics=("parallel", "parallel")),
        cost_estimate=pl.CostEstimate(flops=flops, transcendentals=0,
                                      bytes_accessed=bytes_accessed),
    )(x3, params)

    if hw_pad != HW:
        out3 = out3[:, :, :HW]
    return out3.reshape(N, Cout, H, W)


# ----------------------------- parameter setup (glue) ------------------------

def make_bn(key, c):
    """Random BatchNorm2d params folded to inference-mode scale/bias."""
    k1, k2, k3, k4 = jax.random.split(key, 4)
    gamma = 0.5 + 0.1 * jax.random.normal(k1, (c,), jnp.float32)
    beta = 0.3 + 0.1 * jax.random.normal(k2, (c,), jnp.float32)
    mean = 0.1 * jax.random.normal(k3, (c,), jnp.float32)
    var = 1.0 + 0.2 * jax.random.uniform(k4, (c,), jnp.float32)
    scale = gamma / jnp.sqrt(var + _BN_EPS)
    bias = beta - mean * scale
    return scale, bias


def pack_params(w_q, bn_scale, bn_bias):
    # Fold BN scale and the x255 quantizer scale into the packed block once:
    #   params = [255*bn_scale*w_q | 255*bn_bias]   shape (Cout, Cin+1)
    w_eff = (_QLEVELS * bn_scale)[:, None] * w_q
    b_eff = (_QLEVELS * bn_bias)[:, None]
    return jnp.concatenate([w_eff, b_eff], axis=1)


# ----------------------------- pure-JAX reference ---------------------------

def ref_conv_bn_prelu(x_nchw, w_q, scale, bias):
    y = jnp.einsum('oc,nchw->nohw', w_q, x_nchw,
                   precision=lax.Precision.HIGHEST)
    y = y * scale[None, :, None, None] + bias[None, :, None, None]
    return act_quant(y)


# ----------------------------- main ------------------------------------------

if __name__ == "__main__":
    def run_case(case_key, N, Cin, Cout, H, W):
        kx, kw, kbn = jax.random.split(case_key, 3)
        x = 0.3 * jax.random.normal(kx, (N, Cin, H, W), jnp.float32)

        w_fp = 0.5 * jax.random.normal(kw, (Cout, Cin), jnp.float32)
        w_q = quantize_weight(w_fp)                 # DoReFa 8-bit conv weights
        scale, bias = make_bn(kbn, Cout)            # folded BatchNorm2d
        params = pack_params(w_q, scale, bias)      # (Cout, Cin + 1)

        out = jax.block_until_ready(conv_bn_prelu(x, params))
        ref = jax.block_until_ready(ref_conv_bn_prelu(x, w_q, scale, bias))

        out_np = np.asarray(out)
        ref_np = np.asarray(ref)
        assert out_np.shape == (N, Cout, H, W)

        # Both sides are f32; MXU-vs-einsum accumulation order and the folded
        # scales can only flip rounding ties at the 8-bit quantizer, i.e. a
        # difference of exactly one act-quant LSB (1/255).
        diff = np.abs(out_np - ref_np)
        lsb = 1.0 / _QLEVELS
        assert np.all((diff < 1e-5) | (np.abs(diff - lsb) < 1e-5)), diff.max()
        assert np.mean(diff > 1e-5) < 0.05, "too many quantizer-tie mismatches"
        np.testing.assert_allclose(out_np, ref_np, rtol=0.0, atol=lsb + 1e-6)

    key = jax.random.PRNGKey(0)
    k1, k2 = jax.random.split(key)
    run_case(k1, N=2, Cin=8, Cout=16, H=16, W=16)   # lane-aligned HW (256)
    run_case(k2, N=1, Cin=8, Cout=16, H=15, W=15)   # padded HW + N==1 split path

    print("KERNEL_OK")
</pallas_src>

<mosaic_0001>
module attributes {stable_mosaic.version = 11 : i64} {
  func.func @convbnprelu_kernel(%arg0: i32, %arg1: i32, %arg2: memref<1x8x256xf32, #tpu.memory_space<vmem>>, %arg3: memref<16x9xf32, #tpu.memory_space<vmem>>, %arg4: memref<1x16x256xf32, #tpu.memory_space<vmem>>) attributes {dimension_semantics = [#tpu.dimension_semantics<parallel>, #tpu.dimension_semantics<parallel>], iteration_bounds = array<i64: 2, 1>, scalar_prefetch = 0 : i64, scratch_operands = 0 : i64, tpu.core_type = #tpu.core_type<tc>, window_params = [{transform_indices = @transform_0, window_bounds = array<i64: 1, 8, 256>}, {pipeline_mode = #tpu.pipeline_mode<synchronous>, transform_indices = @transform_1, window_bounds = array<i64: 16, 9>}, {transform_indices = @transform_2, window_bounds = array<i64: 1, 16, 256>}]} {
    %c0 = arith.constant 0 : index
    %c0_0 = arith.constant 0 : index
    %c0_1 = arith.constant 0 : index
    %0 = vector.load %arg2[%c0, %c0_0, %c0_1] : memref<1x8x256xf32, #tpu.memory_space<vmem>>, vector<1x8x256xf32>
    %1 = vector.shape_cast %0 : vector<1x8x256xf32> to vector<8x256xf32>
    %c0_2 = arith.constant 0 : index
    %c0_3 = arith.constant 0 : index
    %2 = vector.load %arg3[%c0_2, %c0_3] : memref<16x9xf32, #tpu.memory_space<vmem>>, vector<16x9xf32>
    %3 = vector.extract_strided_slice %2 {offsets = [0, 0], sizes = [16, 8], strides = [1, 1]} : vector<16x9xf32> to vector<16x8xf32>
    %4 = vector.extract_strided_slice %2 {offsets = [0, 8], sizes = [16, 1], strides = [1, 1]} : vector<16x9xf32> to vector<16x1xf32>
    %cst = arith.constant dense<0.000000e+00> : vector<16x256xf32>
    %5 = tpu.matmul %3, %1, %cst {dimension_numbers = #tpu.dot_dimension_numbers<[1], [0], [0], [1], [0, 0, 1, 1], [], []>, precision = #tpu.contract_precision<fp32>} : vector<16x8xf32>, vector<8x256xf32>, vector<16x256xf32> -> vector<16x256xf32>
    %6 = vector.broadcast %4 : vector<16x1xf32> to vector<16x256xf32>
    %7 = arith.addf %5, %6 : vector<16x256xf32>
    %cst_4 = arith.constant 0.000000e+00 : f32
    %cst_5 = arith.constant 2.550000e+02 : f32
    %8 = vector.broadcast %cst_4 : f32 to vector<16x256xf32>
    %9 = arith.maximumf %8, %7 : vector<16x256xf32>
    %10 = vector.broadcast %cst_5 : f32 to vector<16x256xf32>
    %11 = arith.minimumf %10, %9 : vector<16x256xf32>
    %12 = math.roundeven %11 : vector<16x256xf32>
    %cst_6 = arith.constant 0.00392156886 : f32
    %13 = vector.broadcast %cst_6 : f32 to vector<16x256xf32>
    %14 = arith.mulf %12, %13 : vector<16x256xf32>
    %c0_7 = arith.constant 0 : index
    %c0_8 = arith.constant 0 : index
    %c0_9 = arith.constant 0 : index
    %15 = vector.load %arg4[%c0_7, %c0_8, %c0_9] : memref<1x16x256xf32, #tpu.memory_space<vmem>>, vector<1x16x256xf32>
    %16 = vector.shape_cast %15 : vector<1x16x256xf32> to vector<16x256xf32>
    %17 = vector.shape_cast %14 : vector<16x256xf32> to vector<1x16x256xf32>
    tpu.vector_store %arg4[%c0_7, %c0_8, %c0_9], %17 {strides = array<i32>} : memref<1x16x256xf32, #tpu.memory_space<vmem>>, vector<1x16x256xf32>,
    return
  }
  func.func @transform_0(%arg0: i32, %arg1: i32) -> (i32, i32, i32) {
    %c0_i32 = arith.constant 0 : i32
    %c0_i32_0 = arith.constant 0 : i32
    return %arg0, %c0_i32, %arg1 : i32, i32, i32
  }
  func.func @transform_1(%arg0: i32, %arg1: i32) -> (i32, i32) {
    %c0_i32 = arith.constant 0 : i32
    %c0_i32_0 = arith.constant 0 : i32
    %c0_i32_1 = arith.constant 0 : i32
    return %c0_i32, %c0_i32_0 : i32, i32
  }
  func.func @transform_2(%arg0: i32, %arg1: i32) -> (i32, i32, i32) {
    %c0_i32 = arith.constant 0 : i32
    %c0_i32_0 = arith.constant 0 : i32
    return %arg0, %c0_i32, %arg1 : i32, i32, i32
  }
}

</mosaic_0001>

<llo_original>
// kernel: tpu_custom_call.1
$region0: #{tpu_custom_call.1}
  #allocation0 [shape = 'u32[]', space=smem, size = 0x4, offset = 0x4, fixed_abs, tag = 'smem constant byte address 0x4 - core index']
  #allocation1 [shape = 'u32[144,128]{1,0:T(1,128)}', space=vmem, size = 0x12000, scoped, tag = 'internal scratch']
  %s0 = inlined_call_operand.hbm [shape: f32[2,8,256], index: 0, kind: input, shape index: {}]
  %s1 = inlined_call_operand.hbm [shape: f32[16,9], index: 1, kind: input, shape index: {}]
  %s2 = inlined_call_operand.hbm [shape: f32[2,16,256], index: 2, kind: output, shape index: {}]
  %s3 = sld [smem:[#allocation0]]
  $region49: #{tpu_custom_call.1} parent=0
    _
  %s5 = ssub.s32 1, %s3
  %s6 = scalar_select 0, %s5, %s3
  $region1: #{tpu_custom_call.1} parent=0
    #allocation2 [shape = 'u8[16384]{0}', space=vmem, size = 0x4000, scoped, tag = 'input window, operand 0']
    #allocation3 [shape = 's32[2]{0}', space=sflag, size = 0x8, scoped, tag = 'scoped memory for tpu_custom_call.1']
    #allocation4 [shape = 's32[2]{0}', space=sflag, size = 0x8, scoped, tag = 'scoped memory for tpu_custom_call.1']
    #allocation5 [shape = 'u8[8192]{0}', space=vmem, size = 0x2000, scoped, tag = 'input window, operand 1, single buffered']
    #allocation6 [shape = 's32[1]{0}', space=sflag, size = 0x4, scoped, tag = 'scoped memory for tpu_custom_call.1']
    #allocation7 [shape = 'u8[32768]{0}', space=vmem, size = 0x8000, scoped, tag = 'output window, operand 0']
    %7 = vsyncpa [#allocation3], 0
    %s8 = scalar_lea.sflag [#allocation3], 1
    %9 = vsyncpa %s8, 0
    %10 = vsyncpa [#allocation6], 0
    %11 = vsyncpa [#allocation4], 0
    %s12 = scalar_lea.sflag [#allocation4], 1
    %13 = vsyncpa %s12, 0
    loop: start=0, step=1, limit=4
    $region2: #{tpu_custom_call.1} parent=1 // loop_pre_header
      _
    $region3: #{tpu_custom_call.1} parent=1 // loop_header
      %s15 = sphi 0, %s19
      %p16 = scmp.ge.s32.totalorder %s15, 4
      %s22 = sphi 0, %s34
      %s23 = sphi 0, %s30
      %s24 = sphi 0, %s22
      %s25 = sphi 0, %s23
      %s26 = sphi 0, %s24
      %s27 = sphi 0, %s25
      %s39 = sphi 0, %s41
      %s42 = sphi 0, %s39
      %s43 = sphi 0, %s42
      %s59 = sphi 0, %s43
      %s63 = sphi 0, %s63
      %s65 = sphi 0, %s63
      %s66 = sphi 0, %s65
      %s80 = sphi 0, %s66
      %s88 = sphi 0, %s90
      %s91 = sphi 0, %s88
      %s92 = sphi 0, %s91
      %s108 = sphi 0, %s92
    $region4: #{tpu_custom_call.1} parent=1 // loop_header_branch
      %18 = sbr.rel (%p16) target = $region8
    $region5: #{tpu_custom_call.1} parent=1 // loop_body
      %s20 = ssub.s32 %s15, 1
      %s21 = ssub.s32 %s15, 2
      %s28 = sadd.s32 1, %s23
      %p29 = scmp.ge.s32.totalorder %s28, 1
      %s30 = scalar_select %p29, 0, %s28
      %s31 = sadd.s32 1, %s22
      %s32 = scalar_select %p29, %s31, %s22
      %p33 = scmp.ge.s32.totalorder %s32, 2
      %s34 = scalar_select %p33, 0, %s32
      %s35 = ssub.s32 %s22, %s34
      %s36 = ssub.s32 %s23, %s30
      %s37 = sor.u32 %s35, %s36
      %p38 = scmp.eq.s32.totalorder %s37, 0
      %s40 = sadd.s32 %s39, 1
      %s41 = scalar_select %p38, %s39, %s40
      %p44 = pneg %p38
      %p45 = scmp.eq.s32.totalorder %s15, 1
      %p46 = por %p44, %p45
      %p47 = scmp.ne.s32.totalorder %s39, %s42
      %p48 = scmp.eq.s32.totalorder %s15, 0
      %p49 = por %p47, %p48
      %p50 = scmp.ne.s32.totalorder %s39, %s42
      %p51 = scmp.eq.s32.totalorder %s20, 1
      %p52 = por %p50, %p51
      %p53 = scmp.ne.s32.totalorder %s42, %s43
      %p54 = scmp.eq.s32.totalorder %s20, 0
      %p55 = por %p53, %p54
      %p56 = scmp.ne.s32.totalorder %s42, %s43
      %p57 = scmp.eq.s32.totalorder %s21, 1
      %p58 = por %p56, %p57
      %p60 = scmp.ne.s32.totalorder %s43, %s59
      %p61 = scmp.eq.s32.totalorder %s21, 0
      %p62 = por %p60, %p61
      %s64 = sadd.s32 %s63, 1
      %p67 = scmp.eq.s32.totalorder %s15, 1
      %p68 = scmp.ne.s32.totalorder %s63, %s65
      %p69 = scmp.eq.s32.totalorder %s15, 0
      %p70 = por %p68, %p69
      %p71 = scmp.ne.s32.totalorder %s63, %s65
      %p72 = scmp.eq.s32.totalorder %s20, 1
      %p73 = por %p71, %p72
      %p74 = scmp.ne.s32.totalorder %s65, %s66
      %p75 = scmp.eq.s32.totalorder %s20, 0
      %p76 = por %p74, %p75
      %p77 = scmp.ne.s32.totalorder %s65, %s66
      %p78 = scmp.eq.s32.totalorder %s21, 1
      %p79 = por %p77, %p78
      %p81 = scmp.ne.s32.totalorder %s66, %s80
      %p82 = scmp.eq.s32.totalorder %s21, 0
      %p83 = por %p81, %p82
      %s84 = ssub.s32 %s22, %s34
      %s85 = ssub.s32 %s23, %s30
      %s86 = sor.u32 %s84, %s85
      %p87 = scmp.eq.s32.totalorder %s86, 0
      %s89 = sadd.s32 %s88, 1
      %s90 = scalar_select %p87, %s88, %s89
      %p93 = pneg %p87
      %p94 = scmp.eq.s32.totalorder %s15, 1
      %p95 = por %p93, %p94
      %p96 = scmp.ne.s32.totalorder %s88, %s91
      %p97 = scmp.eq.s32.totalorder %s15, 0
      %p98 = por %p96, %p97
      %p99 = scmp.ne.s32.totalorder %s88, %s91
      %p100 = scmp.eq.s32.totalorder %s20, 1
      %p101 = por %p99, %p100
      %p102 = scmp.ne.s32.totalorder %s91, %s92
      %p103 = scmp.eq.s32.totalorder %s20, 0
      %p104 = por %p102, %p103
      %p105 = scmp.ne.s32.totalorder %s91, %s92
      %p106 = scmp.eq.s32.totalorder %s21, 1
      %p107 = por %p105, %p106
      %p109 = scmp.ne.s32.totalorder %s92, %s108
      %p110 = scmp.eq.s32.totalorder %s21, 0
      %p111 = por %p109, %p110
      %p112 = scmp.le.s32.totalorder 1, %s15
      %p113 = scmp.lt.s32.totalorder %s15, 3
      %p114 = pnand %p112, %p113
      %p115 = pneg %p114
      // Predicated region
      $region9: #{tpu_custom_call.1} parent=5 // pred_check
        _
      $region10: #{tpu_custom_call.1} parent=5 // pred_check_branch
        %117 = sbr.rel (%p114) target = $region12
      $region11: #{tpu_custom_call.1} parent=5 // pred_region
        %s118 = ssub.s32 %s15, 1
        // Predicated region
        $region13: #{tpu_custom_call.1} parent=11 // pred_check
          %p119 = pneg %p76
        $region14: #{tpu_custom_call.1} parent=11 // pred_check_branch
          %121 = sbr.rel (%p119) target = $region16
        $region15: #{tpu_custom_call.1} parent=11 // pred_region
          %s123 = ssub.s32 256, 256
          %124 = vsyncadd [#allocation6], %s123
          %s125 = sshll.u32 [#allocation5], 4
          %s126 = int_to_ptr.vmem [resolvable:$true] %s125
          %131 = dma.hbm_to_vmem [thread:$0]  %s1, 256, %s126, [#allocation6], 128, 128, 8
        $region16: #{tpu_custom_call.1} parent=11 // pred_fallthru
          _
      $region12: #{tpu_custom_call.1} parent=5 // pred_fallthru
        _
      %p132 = scmp.lt.s32.totalorder %s15, 2
      // Predicated region
      $region17: #{tpu_custom_call.1} parent=5 // pred_check
        %p133 = pneg %p132
      $region18: #{tpu_custom_call.1} parent=5 // pred_check_branch
        %135 = sbr.rel (%p133) target = $region20
      $region19: #{tpu_custom_call.1} parent=5 // pred_region
        // Predicated region
        $region21: #{tpu_custom_call.1} parent=19 // pred_check
          %p136 = pneg %p49
        $region22: #{tpu_custom_call.1} parent=19 // pred_check_branch
          %138 = sbr.rel (%p136) target = $region24
        $region23: #{tpu_custom_call.1} parent=19 // pred_region
          %s139 = sand.u32 %s39, 1
          %s140 = scalar_lea.sflag [#allocation3], %s139
          %s141 = sand.u32 %s39, 1
          %s142 = smul.addr %s141, 16
          %s143 = scalar_lea.vmem [#allocation2], %s142
          %s144 = smul.u32 2, %s23
          %s146 = ssub.s32 256, 256
          %147 = vsyncadd %s140, %s146
          %s148 = smul.addr %s22, 2
          %s149 = sadd.s32 %s144, %s148
          %s150 = smul.addr %s149, 128
          %s151 = scalar_lea.hbm %s0, %s150
          %s153 = sshll.u32 %s143, 4
          %s154 = int_to_ptr.vmem [resolvable:$true] %s153
          %156 = dma.hbm_to_vmem [thread:$0]  %s151, 256, %s154, %s140
        $region24: #{tpu_custom_call.1} parent=19 // pred_fallthru
          _
      $region20: #{tpu_custom_call.1} parent=5 // pred_fallthru
        _
      %p157 = scmp.le.s32.totalorder 1, %s15
      %p158 = scmp.lt.s32.totalorder %s15, 3
      %p159 = pnand %p157, %p158
      %p160 = pneg %p159
      // Predicated region
      $region25: #{tpu_custom_call.1} parent=5 // pred_check
        _
      $region26: #{tpu_custom_call.1} parent=5 // pred_check_branch
        %162 = sbr.rel (%p159) target = $region28
      $region27: #{tpu_custom_call.1} parent=5 // pred_region
        %s163 = ssub.s32 %s15, 1
        %s164 = sand.u32 %s42, 1
        %s165 = scalar_lea.sflag [#allocation3], %s164
        %s166 = sand.u32 %s42, 1
        %s167 = smul.addr %s166, 16
        %s168 = scalar_lea.vmem [#allocation2], %s167
        // Predicated region
        $region29: #{tpu_custom_call.1} parent=27 // pred_check
          %p169 = pneg %p55
        $region30: #{tpu_custom_call.1} parent=27 // pred_check_branch
          %171 = sbr.rel (%p169) target = $region32
        $region31: #{tpu_custom_call.1} parent=27 // pred_region
          %172 = dma.done %s165, 256
        $region32: #{tpu_custom_call.1} parent=27 // pred_fallthru
          _
        // Predicated region
        $region33: #{tpu_custom_call.1} parent=27 // pred_check
          %p173 = pneg %p76
        $region34: #{tpu_custom_call.1} parent=27 // pred_check_branch
          %175 = sbr.rel (%p173) target = $region36
        $region35: #{tpu_custom_call.1} parent=27 // pred_region
          %176 = dma.done [#allocation6], 256
        $region36: #{tpu_custom_call.1} parent=27 // pred_fallthru
          _
        %s177 = sand.u32 %s42, 1
        %s178 = scalar_lea.sflag [#allocation3], %s177
        %s179 = sand.u32 %s42, 1
        %s180 = smul.addr %s179, 16
        %s181 = scalar_lea.vmem [#allocation2], %s180
        %p182 = pneg %p55
        %p183 = pneg %p52
        %p184 = pneg %p76
        %p185 = pneg %p73
        %p186 = pneg %p104
        %p187 = pneg %p101
        %s188 = sand.u32 %s91, 1
        %s189 = scalar_lea.sflag [#allocation4], %s188
        %s190 = sand.u32 %s91, 1
        %s191 = smul.addr %s190, 32
        %s192 = scalar_lea.vmem [#allocation7], %s191
        %s193 = smul.u32 2, %s25
        %s194 = smul.u32 2, %s25
        %v195 = vld [vmem:[%s168] sm:$0xff]
        %v196 = vld [vmem:[%s168 + $0x8] sm:$0xff]
        %v197 = vld [vmem:[#allocation5] sm:$0xff]
        %v198 = vld [vmem:[#allocation5 + $0x8] sm:$0xff]
        %200 = vset.pattern.permute.xlu0 8
        %201 = vperm.xlu0 %200, %v197
        %v202 = vpop.permute.xlu0 %201
        %205 = vset.pattern.permute.xlu0 8
        %206 = vperm.xlu0 %205, %v198
        %v207 = vpop.permute.xlu0 %206
        %vm209 = vcmask 64512
        %v210 = vsel %vm209, %v197, 0
        %v212 = vsel %vm209, %v198, 0
        %v214 = vand.u32 %v196, 4294901760
        %215 = vmatprep.subr.mxu0 %v214
        %v216 = vand.u32 %v195, 4294901760
        %217 = vmatpush1.msra.mxu0 %v216
        %218 = vmatprep.subr.mxu0 0.0
        %219 = vmatpush1.msra.mxu0 0.0
        %220 = vmatprep.subr.mxu0 0.0
        %221 = vmatpush1.msra.mxu0 0.0
        %222 = vmatprep.subr.mxu0 0.0
        %223 = vmatpush1.msra.mxu0 0.0
        %224 = vmatprep.subr.mxu0 0.0
        %225 = vmatpush1.msra.mxu0 0.0
        %226 = vmatprep.subr.mxu0 0.0
        %227 = vmatpush1.msra.mxu0 0.0
        %228 = vmatprep.subr.mxu0 0.0
        %229 = vmatpush1.msra.mxu0 0.0
        %230 = vmatprep.subr.mxu0 0.0
        %231 = vmatpush1.msra.mxu0 0.0
        %232 = vmatprep.subr.mxu0 0.0
        %233 = vmatpush1.msra.mxu0 0.0
        %234 = vmatprep.subr.mxu0 0.0
        %235 = vmatpush1.msra.mxu0 0.0
        %236 = vmatprep.subr.mxu0 0.0
        %237 = vmatpush1.msra.mxu0 0.0
        %238 = vmatprep.subr.mxu0 0.0
        %239 = vmatpush1.msra.mxu0 0.0
        %240 = vmatprep.subr.mxu0 0.0
        %241 = vmatpush1.msra.mxu0 0.0
        %242 = vmatprep.subr.mxu0 0.0
        %243 = vmatpush1.msra.mxu0 0.0
        %244 = vmatprep.subr.mxu0 0.0
        %245 = vmatpush1.msra.mxu0 0.0
        %246 = vmatprep.subr.mxu0 0.0
        %247 = vmatpush1.msra.mxu0 0.0
        %248 = vmatprep.subr.mxu0 0.0
        %249 = vmatpush1.msra.mxu0 0.0
        %250 = vmatprep.subr.mxu0 0.0
        %251 = vmatpush1.msra.mxu0 0.0
        %252 = vmatprep.subr.mxu0 0.0
        %253 = vmatpush1.msra.mxu0 0.0
        %254 = vmatprep.subr.mxu0 0.0
        %255 = vmatpush1.msra.mxu0 0.0
        %256 = vmatprep.subr.mxu0 0.0
        %257 = vmatpush1.msra.mxu0 0.0
        %258 = vmatprep.subr.mxu0 0.0
        %259 = vmatpush1.msra.mxu0 0.0
        %260 = vmatprep.subr.mxu0 0.0
        %261 = vmatpush1.msra.mxu0 0.0
        %262 = vmatprep.subr.mxu0 0.0
        %263 = vmatpush1.msra.mxu0 0.0
        %264 = vmatprep.subr.mxu0 0.0
        %265 = vmatpush1.msra.mxu0 0.0
        %266 = vmatprep.subr.mxu0 0.0
        %267 = vmatpush1.msra.mxu0 0.0
        %268 = vmatprep.subr.mxu0 0.0
        %269 = vmatpush1.msra.mxu0 0.0
        %270 = vmatprep.subr.mxu0 0.0
        %271 = vmatpush1.msra.mxu0 0.0
        %272 = vmatprep.subr.mxu0 0.0
        %273 = vmatpush1.msra.mxu0 0.0
        %274 = vmatprep.subr.mxu0 0.0
        %275 = vmatpush1.msra.mxu0 0.0
        %276 = vmatprep.subr.mxu0 0.0
        %277 = vmatpush1.msra.mxu0 0.0
        %278 = vmatprep.subr.mxu0 0.0
        %279 = vmatpush1.msra.mxu0 0.0
        %280 = vmatprep.mubr.f32.mxu0 0.0
        %v281 = vand.u32 %v210, 4294901760
        %v282 = vsub.f32 %v210, %v281
        %v283 = vand.u32 %v282, 4294901760
        %v284 = vsub.f32 %v282, %v283
        %v285 = vand.u32 %v284, 4294901760
        %286 = vmatmul.mubr.f32.gmra.mrb[0].mxu0 %v285
        %v287 = vpop.f32.mrb[0].mxu0
        %v288 = vadd.f32 %v202, %v287
        %v289 = vpop.f32.mrb[0].mxu0
        %v290 = vadd.f32 %v202, %v289
        %291 = vmatprep.mubr.f32.mxu0 0.0
        %v292 = vand.u32 %v212, 4294901760
        %v293 = vsub.f32 %v212, %v292
        %v294 = vand.u32 %v293, 4294901760
        %v295 = vsub.f32 %v293, %v294
        %v296 = vand.u32 %v295, 4294901760
        %297 = vmatmul.mubr.f32.gmra.mrb[0].mxu0 %v296
        %v298 = vpop.f32.mrb[0].mxu0
        %v299 = vadd.f32 %v207, %v298
        %v300 = vpop.f32.mrb[0].mxu0
        %v301 = vadd.f32 %v207, %v300
        %302 = vdwg.mxu0
        %v303 = vand.u32 %v196, 4294901760
        %v304 = vsub.f32 %v196, %v303
        %v305 = vand.u32 %v304, 4294901760
        %v306 = vsub.f32 %v304, %v305
        %v307 = vand.u32 %v306, 4294901760
        %308 = vmatprep.subr.mxu0 %v307
        %v309 = vand.u32 %v195, 4294901760
        %v310 = vsub.f32 %v195, %v309
        %v311 = vand.u32 %v310, 4294901760
        %v312 = vsub.f32 %v310, %v311
        %v313 = vand.u32 %v312, 4294901760
        %314 = vmatpush1.msra.mxu0 %v313
        %315 = vmatprep.subr.mxu0 0.0
        %316 = vmatpush1.msra.mxu0 0.0
        %317 = vmatprep.subr.mxu0 0.0
        %318 = vmatpush1.msra.mxu0 0.0
        %319 = vmatprep.subr.mxu0 0.0
        %320 = vmatpush1.msra.mxu0 0.0
        %321 = vmatprep.subr.mxu0 0.0
        %322 = vmatpush1.msra.mxu0 0.0
        %323 = vmatprep.subr.mxu0 0.0
        %324 = vmatpush1.msra.mxu0 0.0
        %325 = vmatprep.subr.mxu0 0.0
        %326 = vmatpush1.msra.mxu0 0.0
        %327 = vmatprep.subr.mxu0 0.0
        %328 = vmatpush1.msra.mxu0 0.0
        %329 = vmatprep.subr.mxu0 0.0
        %330 = vmatpush1.msra.mxu0 0.0
        %331 = vmatprep.subr.mxu0 0.0
        %332 = vmatpush1.msra.mxu0 0.0
        %333 = vmatprep.subr.mxu0 0.0
        %334 = vmatpush1.msra.mxu0 0.0
        %335 = vmatprep.subr.mxu0 0.0
        %336 = vmatpush1.msra.mxu0 0.0
        %337 = vmatprep.subr.mxu0 0.0
        %338 = vmatpush1.msra.mxu0 0.0
        %339 = vmatprep.subr.mxu0 0.0
        %340 = vmatpush1.msra.mxu0 0.0
        %341 = vmatprep.subr.mxu0 0.0
        %342 = vmatpush1.msra.mxu0 0.0
        %343 = vmatprep.subr.mxu0 0.0
        %344 = vmatpush1.msra.mxu0 0.0
        %345 = vmatprep.subr.mxu0 0.0
        %346 = vmatpush1.msra.mxu0 0.0
        %347 = vmatprep.subr.mxu0 0.0
        %348 = vmatpush1.msra.mxu0 0.0
        %349 = vmatprep.subr.mxu0 0.0
        %350 = vmatpush1.msra.mxu0 0.0
        %351 = vmatprep.subr.mxu0 0.0
        %352 = vmatpush1.msra.mxu0 0.0
        %353 = vmatprep.subr.mxu0 0.0
        %354 = vmatpush1.msra.mxu0 0.0
        %355 = vmatprep.subr.mxu0 0.0
        %356 = vmatpush1.msra.mxu0 0.0
        %357 = vmatprep.subr.mxu0 0.0
        %358 = vmatpush1.msra.mxu0 0.0
        %359 = vmatprep.subr.mxu0 0.0
        %360 = vmatpush1.msra.mxu0 0.0
        %361 = vmatprep.subr.mxu0 0.0
        %362 = vmatpush1.msra.mxu0 0.0
        %363 = vmatprep.subr.mxu0 0.0
        %364 = vmatpush1.msra.mxu0 0.0
        %365 = vmatprep.subr.mxu0 0.0
        %366 = vmatpush1.msra.mxu0 0.0
        %367 = vmatprep.subr.mxu0 0.0
        %368 = vmatpush1.msra.mxu0 0.0
        %369 = vmatprep.subr.mxu0 0.0
        %370 = vmatpush1.msra.mxu0 0.0
        %371 = vmatprep.subr.mxu0 0.0
        %372 = vmatpush1.msra.mxu0 0.0
        %373 = vmatprep.subr.mxu0 0.0
        %374 = vmatpush1.msra.mxu0 0.0
        %375 = vmatprep.subr.mxu0 0.0
        %376 = vmatpush1.msra.mxu0 0.0
        %377 = vmatprep.mubr.f32.mxu0 0.0
        %v378 = vand.u32 %v210, 4294901760
        %379 = vmatmul.mubr.f32.gmra.mrb[0].mxu0 %v378
        %v380 = vpop.f32.mrb[0].mxu0
        %v381 = vadd.f32 %v288, %v380
        %v382 = vpop.f32.mrb[0].mxu0
        %v383 = vadd.f32 %v290, %v382
        %384 = vmatprep.mubr.f32.mxu0 0.0
        %v385 = vand.u32 %v212, 4294901760
        %386 = vmatmul.mubr.f32.gmra.mrb[0].mxu0 %v385
        %v387 = vpop.f32.mrb[0].mxu0
        %v388 = vadd.f32 %v299, %v387
        %v389 = vpop.f32.mrb[0].mxu0
        %v390 = vadd.f32 %v301, %v389
        %391 = vdwg.mxu0
        %v392 = vand.u32 %v196, 4294901760
        %v393 = vsub.f32 %v196, %v392
        %394 = vmatprep.subr.mxu0 %v393
        %v395 = vand.u32 %v195, 4294901760
        %v396 = vsub.f32 %v195, %v395
        %397 = vmatpush1.msra.mxu0 %v396
        %398 = vmatprep.subr.mxu0 0.0
        %399 = vmatpush1.msra.mxu0 0.0
        %400 = vmatprep.subr.mxu0 0.0
        %401 = vmatpush1.msra.mxu0 0.0
        %402 = vmatprep.subr.mxu0 0.0
        %403 = vmatpush1.msra.mxu0 0.0
        %404 = vmatprep.subr.mxu0 0.0
        %405 = vmatpush1.msra.mxu0 0.0
        %406 = vmatprep.subr.mxu0 0.0
        %407 = vmatpush1.msra.mxu0 0.0
        %408 = vmatprep.subr.mxu0 0.0
        %409 = vmatpush1.msra.mxu0 0.0
        %410 = vmatprep.subr.mxu0 0.0
        %411 = vmatpush1.msra.mxu0 0.0
        %412 = vmatprep.subr.mxu0 0.0
        %413 = vmatpush1.msra.mxu0 0.0
        %414 = vmatprep.subr.mxu0 0.0
        %415 = vmatpush1.msra.mxu0 0.0
        %416 = vmatprep.subr.mxu0 0.0
        %417 = vmatpush1.msra.mxu0 0.0
        %418 = vmatprep.subr.mxu0 0.0
        %419 = vmatpush1.msra.mxu0 0.0
        %420 = vmatprep.subr.mxu0 0.0
        %421 = vmatpush1.msra.mxu0 0.0
        %422 = vmatprep.subr.mxu0 0.0
        %423 = vmatpush1.msra.mxu0 0.0
        %424 = vmatprep.subr.mxu0 0.0
        %425 = vmatpush1.msra.mxu0 0.0
        %426 = vmatprep.subr.mxu0 0.0
        %427 = vmatpush1.msra.mxu0 0.0
        %428 = vmatprep.subr.mxu0 0.0
        %429 = vmatpush1.msra.mxu0 0.0
        %430 = vmatprep.subr.mxu0 0.0
        %431 = vmatpush1.msra.mxu0 0.0
        %432 = vmatprep.subr.mxu0 0.0
        %433 = vmatpush1.msra.mxu0 0.0
        %434 = vmatprep.subr.mxu0 0.0
        %435 = vmatpush1.msra.mxu0 0.0
        %436 = vmatprep.subr.mxu0 0.0
        %437 = vmatpush1.msra.mxu0 0.0
        %438 = vmatprep.subr.mxu0 0.0
        %439 = vmatpush1.msra.mxu0 0.0
        %440 = vmatprep.subr.mxu0 0.0
        %441 = vmatpush1.msra.mxu0 0.0
        %442 = vmatprep.subr.mxu0 0.0
        %443 = vmatpush1.msra.mxu0 0.0
        %444 = vmatprep.subr.mxu0 0.0
        %445 = vmatpush1.msra.mxu0 0.0
        %446 = vmatprep.subr.mxu0 0.0
        %447 = vmatpush1.msra.mxu0 0.0
        %448 = vmatprep.subr.mxu0 0.0
        %449 = vmatpush1.msra.mxu0 0.0
        %450 = vmatprep.subr.mxu0 0.0
        %451 = vmatpush1.msra.mxu0 0.0
        %452 = vmatprep.subr.mxu0 0.0
        %453 = vmatpush1.msra.mxu0 0.0
        %454 = vmatprep.subr.mxu0 0.0
        %455 = vmatpush1.msra.mxu0 0.0
        %456 = vmatprep.subr.mxu0 0.0
        %457 = vmatpush1.msra.mxu0 0.0
        %458 = vmatprep.subr.mxu0 0.0
        %459 = vmatpush1.msra.mxu0 0.0
        %460 = vmatprep.mubr.f32.mxu0 0.0
        %v461 = vand.u32 %v210, 4294901760
        %v462 = vsub.f32 %v210, %v461
        %463 = vmatmul.mubr.f32.gmra.mrb[0].mxu0 %v462
        %v464 = vpop.f32.mrb[0].mxu0
        %v465 = vadd.f32 %v381, %v464
        %v466 = vpop.f32.mrb[0].mxu0
        %v467 = vadd.f32 %v383, %v466
        %468 = vmatprep.mubr.f32.mxu0 0.0
        %v469 = vand.u32 %v212, 4294901760
        %v470 = vsub.f32 %v212, %v469
        %471 = vmatmul.mubr.f32.gmra.mrb[0].mxu0 %v470
        %v472 = vpop.f32.mrb[0].mxu0
        %v473 = vadd.f32 %v388, %v472
        %v474 = vpop.f32.mrb[0].mxu0
        %v475 = vadd.f32 %v390, %v474
        %476 = vdwg.mxu0
        %v477 = vand.u32 %v196, 4294901760
        %478 = vmatprep.subr.mxu0 %v477
        %v479 = vand.u32 %v195, 4294901760
        %480 = vmatpush1.msra.mxu0 %v479
        %481 = vmatprep.subr.mxu0 0.0
        %482 = vmatpush1.msra.mxu0 0.0
        %483 = vmatprep.subr.mxu0 0.0
        %484 = vmatpush1.msra.mxu0 0.0
        %485 = vmatprep.subr.mxu0 0.0
        %486 = vmatpush1.msra.mxu0 0.0
        %487 = vmatprep.subr.mxu0 0.0
        %488 = vmatpush1.msra.mxu0 0.0
        %489 = vmatprep.subr.mxu0 0.0
        %490 = vmatpush1.msra.mxu0 0.0
        %491 = vmatprep.subr.mxu0 0.0
        %492 = vmatpush1.msra.mxu0 0.0
        %493 = vmatprep.subr.mxu0 0.0
        %494 = vmatpush1.msra.mxu0 0.0
        %495 = vmatprep.subr.mxu0 0.0
        %496 = vmatpush1.msra.mxu0 0.0
        %497 = vmatprep.subr.mxu0 0.0
        %498 = vmatpush1.msra.mxu0 0.0
        %499 = vmatprep.subr.mxu0 0.0
        %500 = vmatpush1.msra.mxu0 0.0
        %501 = vmatprep.subr.mxu0 0.0
        %502 = vmatpush1.msra.mxu0 0.0
        %503 = vmatprep.subr.mxu0 0.0
        %504 = vmatpush1.msra.mxu0 0.0
        %505 = vmatprep.subr.mxu0 0.0
        %506 = vmatpush1.msra.mxu0 0.0
        %507 = vmatprep.subr.mxu0 0.0
        %508 = vmatpush1.msra.mxu0 0.0
        %509 = vmatprep.subr.mxu0 0.0
        %510 = vmatpush1.msra.mxu0 0.0
        %511 = vmatprep.subr.mxu0 0.0
        %512 = vmatpush1.msra.mxu0 0.0
        %513 = vmatprep.subr.mxu0 0.0
        %514 = vmatpush1.msra.mxu0 0.0
        %515 = vmatprep.subr.mxu0 0.0
        %516 = vmatpush1.msra.mxu0 0.0
        %517 = vmatprep.subr.mxu0 0.0
        %518 = vmatpush1.msra.mxu0 0.0
        %519 = vmatprep.subr.mxu0 0.0
        %520 = vmatpush1.msra.mxu0 0.0
        %521 = vmatprep.subr.mxu0 0.0
        %522 = vmatpush1.msra.mxu0 0.0
        %523 = vmatprep.subr.mxu0 0.0
        %524 = vmatpush1.msra.mxu0 0.0
        %525 = vmatprep.subr.mxu0 0.0
        %526 = vmatpush1.msra.mxu0 0.0
        %527 = vmatprep.subr.mxu0 0.0
        %528 = vmatpush1.msra.mxu0 0.0
        %529 = vmatprep.subr.mxu0 0.0
        %530 = vmatpush1.msra.mxu0 0.0
        %531 = vmatprep.subr.mxu0 0.0
        %532 = vmatpush1.msra.mxu0 0.0
        %533 = vmatprep.subr.mxu0 0.0
        %534 = vmatpush1.msra.mxu0 0.0
        %535 = vmatprep.subr.mxu0 0.0
        %536 = vmatpush1.msra.mxu0 0.0
        %537 = vmatprep.subr.mxu0 0.0
        %538 = vmatpush1.msra.mxu0 0.0
        %539 = vmatprep.subr.mxu0 0.0
        %540 = vmatpush1.msra.mxu0 0.0
        %541 = vmatprep.subr.mxu0 0.0
        %542 = vmatpush1.msra.mxu0 0.0
        %543 = vmatprep.mubr.f32.mxu0 0.0
        %v544 = vand.u32 %v210, 4294901760
        %v545 = vsub.f32 %v210, %v544
        %v546 = vand.u32 %v545, 4294901760
        %547 = vmatmul.mubr.f32.gmra.mrb[0].mxu0 %v546
        %v548 = vpop.f32.mrb[0].mxu0
        %v549 = vadd.f32 %v465, %v548
        %v550 = vpop.f32.mrb[0].mxu0
        %v551 = vadd.f32 %v467, %v550
        %552 = vmatprep.mubr.f32.mxu0 0.0
        %v553 = vand.u32 %v212, 4294901760
        %v554 = vsub.f32 %v212, %v553
        %v555 = vand.u32 %v554, 4294901760
        %556 = vmatmul.mubr.f32.gmra.mrb[0].mxu0 %v555
        %v557 = vpop.f32.mrb[0].mxu0
        %v558 = vadd.f32 %v473, %v557
        %v559 = vpop.f32.mrb[0].mxu0
        %v560 = vadd.f32 %v475, %v559
        %561 = vdwg.mxu0
        %v562 = vand.u32 %v196, 4294901760
        %v563 = vsub.f32 %v196, %v562
        %v564 = vand.u32 %v563, 4294901760
        %565 = vmatprep.subr.mxu0 %v564
        %v566 = vand.u32 %v195, 4294901760
        %v567 = vsub.f32 %v195, %v566
        %v568 = vand.u32 %v567, 4294901760
        %569 = vmatpush1.msra.mxu0 %v568
        %570 = vmatprep.subr.mxu0 0.0
        %571 = vmatpush1.msra.mxu0 0.0
        %572 = vmatprep.subr.mxu0 0.0
        %573 = vmatpush1.msra.mxu0 0.0
        %574 = vmatprep.subr.mxu0 0.0
        %575 = vmatpush1.msra.mxu0 0.0
        %576 = vmatprep.subr.mxu0 0.0
        %577 = vmatpush1.msra.mxu0 0.0
        %578 = vmatprep.subr.mxu0 0.0
        %579 = vmatpush1.msra.mxu0 0.0
        %580 = vmatprep.subr.mxu0 0.0
        %581 = vmatpush1.msra.mxu0 0.0
        %582 = vmatprep.subr.mxu0 0.0
        %583 = vmatpush1.msra.mxu0 0.0
        %584 = vmatprep.subr.mxu0 0.0
        %585 = vmatpush1.msra.mxu0 0.0
        %586 = vmatprep.subr.mxu0 0.0
        %587 = vmatpush1.msra.mxu0 0.0
        %588 = vmatprep.subr.mxu0 0.0
        %589 = vmatpush1.msra.mxu0 0.0
        %590 = vmatprep.subr.mxu0 0.0
        %591 = vmatpush1.msra.mxu0 0.0
        %592 = vmatprep.subr.mxu0 0.0
        %593 = vmatpush1.msra.mxu0 0.0
        %594 = vmatprep.subr.mxu0 0.0
        %595 = vmatpush1.msra.mxu0 0.0
        %596 = vmatprep.subr.mxu0 0.0
        %597 = vmatpush1.msra.mxu0 0.0
        %598 = vmatprep.subr.mxu0 0.0
        %599 = vmatpush1.msra.mxu0 0.0
        %600 = vmatprep.subr.mxu0 0.0
        %601 = vmatpush1.msra.mxu0 0.0
        %602 = vmatprep.subr.mxu0 0.0
        %603 = vmatpush1.msra.mxu0 0.0
        %604 = vmatprep.subr.mxu0 0.0
        %605 = vmatpush1.msra.mxu0 0.0
        %606 = vmatprep.subr.mxu0 0.0
        %607 = vmatpush1.msra.mxu0 0.0
        %608 = vmatprep.subr.mxu0 0.0
        %609 = vmatpush1.msra.mxu0 0.0
        %610 = vmatprep.subr.mxu0 0.0
        %611 = vmatpush1.msra.mxu0 0.0
        %612 = vmatprep.subr.mxu0 0.0
        %613 = vmatpush1.msra.mxu0 0.0
        %614 = vmatprep.subr.mxu0 0.0
        %615 = vmatpush1.msra.mxu0 0.0
        %616 = vmatprep.subr.mxu0 0.0
        %617 = vmatpush1.msra.mxu0 0.0
        %618 = vmatprep.subr.mxu0 0.0
        %619 = vmatpush1.msra.mxu0 0.0
        %620 = vmatprep.subr.mxu0 0.0
        %621 = vmatpush1.msra.mxu0 0.0
        %622 = vmatprep.subr.mxu0 0.0
        %623 = vmatpush1.msra.mxu0 0.0
        %624 = vmatprep.subr.mxu0 0.0
        %625 = vmatpush1.msra.mxu0 0.0
        %626 = vmatprep.subr.mxu0 0.0
        %627 = vmatpush1.msra.mxu0 0.0
        %628 = vmatprep.subr.mxu0 0.0
        %629 = vmatpush1.msra.mxu0 0.0
        %630 = vmatprep.subr.mxu0 0.0
        %631 = vmatpush1.msra.mxu0 0.0
        %632 = vmatprep.mubr.f32.mxu0 0.0
        %v633 = vand.u32 %v210, 4294901760
        %634 = vmatmul.mubr.f32.gmra.mrb[0].mxu0 %v633
        %v635 = vpop.f32.mrb[0].mxu0
        %v636 = vadd.f32 %v549, %v635
        %v637 = vpop.f32.mrb[0].mxu0
        %v638 = vadd.f32 %v551, %v637
        %639 = vmatprep.mubr.f32.mxu0 0.0
        %v640 = vand.u32 %v212, 4294901760
        %641 = vmatmul.mubr.f32.gmra.mrb[0].mxu0 %v640
        %v642 = vpop.f32.mrb[0].mxu0
        %v643 = vadd.f32 %v558, %v642
        %v644 = vpop.f32.mrb[0].mxu0
        %v645 = vadd.f32 %v560, %v644
        %646 = vdwg.mxu0
        %v647 = vand.u32 %v196, 4294901760
        %648 = vmatprep.subr.mxu0 %v647
        %v649 = vand.u32 %v195, 4294901760
        %650 = vmatpush1.msra.mxu0 %v649
        %651 = vmatprep.subr.mxu0 0.0
        %652 = vmatpush1.msra.mxu0 0.0
        %653 = vmatprep.subr.mxu0 0.0
        %654 = vmatpush1.msra.mxu0 0.0
        %655 = vmatprep.subr.mxu0 0.0
        %656 = vmatpush1.msra.mxu0 0.0
        %657 = vmatprep.subr.mxu0 0.0
        %658 = vmatpush1.msra.mxu0 0.0
        %659 = vmatprep.subr.mxu0 0.0
        %660 = vmatpush1.msra.mxu0 0.0
        %661 = vmatprep.subr.mxu0 0.0
        %662 = vmatpush1.msra.mxu0 0.0
        %663 = vmatprep.subr.mxu0 0.0
        %664 = vmatpush1.msra.mxu0 0.0
        %665 = vmatprep.subr.mxu0 0.0
        %666 = vmatpush1.msra.mxu0 0.0
        %667 = vmatprep.subr.mxu0 0.0
        %668 = vmatpush1.msra.mxu0 0.0
        %669 = vmatprep.subr.mxu0 0.0
        %670 = vmatpush1.msra.mxu0 0.0
        %671 = vmatprep.subr.mxu0 0.0
        %672 = vmatpush1.msra.mxu0 0.0
        %673 = vmatprep.subr.mxu0 0.0
        %674 = vmatpush1.msra.mxu0 0.0
        %675 = vmatprep.subr.mxu0 0.0
        %676 = vmatpush1.msra.mxu0 0.0
        %677 = vmatprep.subr.mxu0 0.0
        %678 = vmatpush1.msra.mxu0 0.0
        %679 = vmatprep.subr.mxu0 0.0
        %680 = vmatpush1.msra.mxu0 0.0
        %681 = vmatprep.subr.mxu0 0.0
        %682 = vmatpush1.msra.mxu0 0.0
        %683 = vmatprep.subr.mxu0 0.0
        %684 = vmatpush1.msra.mxu0 0.0
        %685 = vmatprep.subr.mxu0 0.0
        %686 = vmatpush1.msra.mxu0 0.0
        %687 = vmatprep.subr.mxu0 0.0
        %688 = vmatpush1.msra.mxu0 0.0
        %689 = vmatprep.subr.mxu0 0.0
        %690 = vmatpush1.msra.mxu0 0.0
        %691 = vmatprep.subr.mxu0 0.0
        %692 = vmatpush1.msra.mxu0 0.0
        %693 = vmatprep.subr.mxu0 0.0
        %694 = vmatpush1.msra.mxu0 0.0
        %695 = vmatprep.subr.mxu0 0.0
        %696 = vmatpush1.msra.mxu0 0.0
        %697 = vmatprep.subr.mxu0 0.0
        %698 = vmatpush1.msra.mxu0 0.0
        %699 = vmatprep.subr.mxu0 0.0
        %700 = vmatpush1.msra.mxu0 0.0
        %701 = vmatprep.subr.mxu0 0.0
        %702 = vmatpush1.msra.mxu0 0.0
        %703 = vmatprep.subr.mxu0 0.0
        %704 = vmatpush1.msra.mxu0 0.0
        %705 = vmatprep.subr.mxu0 0.0
        %706 = vmatpush1.msra.mxu0 0.0
        %707 = vmatprep.subr.mxu0 0.0
        %708 = vmatpush1.msra.mxu0 0.0
        %709 = vmatprep.subr.mxu0 0.0
        %710 = vmatpush1.msra.mxu0 0.0
        %711 = vmatprep.subr.mxu0 0.0
        %712 = vmatpush1.msra.mxu0 0.0
        %713 = vmatprep.mubr.f32.mxu0 0.0
        %v714 = vand.u32 %v210, 4294901760
        %715 = vmatmul.mubr.f32.gmra.mrb[0].mxu0 %v714
        %v716 = vpop.f32.mrb[0].mxu0
        %v717 = vadd.f32 %v636, %v716
        %v718 = vpop.f32.mrb[0].mxu0
        %v719 = vadd.f32 %v638, %v718
        %720 = vmatprep.mubr.f32.mxu0 0.0
        %v721 = vand.u32 %v212, 4294901760
        %722 = vmatmul.mubr.f32.gmra.mrb[0].mxu0 %v721
        %v723 = vpop.f32.mrb[0].mxu0
        %v724 = vadd.f32 %v643, %v723
        %v725 = vpop.f32.mrb[0].mxu0
        %v726 = vadd.f32 %v645, %v725
        %727 = vdwg.mxu0
        %v728 = vmax.f32 %v717, 0.0
        %v729 = vmax.f32 %v719, 0.0
        %v730 = vmax.f32 %v724, 0.0
        %v731 = vmax.f32 %v726, 0.0
        %v732 = vmin.f32 %v728, 255.0
        %v733 = vmin.f32 %v729, 255.0
        %v734 = vmin.f32 %v730, 255.0
        %v735 = vmin.f32 %v731, 255.0
        %v736 = vround.ne.pseudo %v732
        %v737 = vround.ne.pseudo %v733
        %v738 = vround.ne.pseudo %v734
        %v739 = vround.ne.pseudo %v735
        %v740 = vmul.f32 %v736, 0.003921569
        %v741 = vmul.f32 %v737, 0.003921569
        %v742 = vmul.f32 %v738, 0.003921569
        %v743 = vmul.f32 %v739, 0.003921569
        %744 = vst [vmem:[%s192] sm:$0xff] %v740
        %745 = vst [vmem:[%s192 + $0x8] sm:$0xff] %v741
        %746 = vst [vmem:[%s192 + $0x10] sm:$0xff] %v742
        %747 = vst [vmem:[%s192 + $0x18] sm:$0xff] %v743
        %s748 = sand.u32 %s91, 1
        %s749 = scalar_lea.sflag [#allocation4], %s748
        %s750 = sand.u32 %s91, 1
        %s751 = smul.addr %s750, 32
        %s752 = scalar_lea.vmem [#allocation7], %s751
        // Predicated region
        $region37: #{tpu_custom_call.1} parent=27 // pred_check
          %p753 = pneg %p101
        $region38: #{tpu_custom_call.1} parent=27 // pred_check_branch
          %755 = sbr.rel (%p753) target = $region40
        $region39: #{tpu_custom_call.1} parent=27 // pred_region
          %s756 = smul.u32 2, %s25
          %s758 = ssub.s32 512, 512
          %759 = vsyncadd %s749, %s758
          %s760 = smul.addr %s24, 4
          %s761 = sadd.s32 %s756, %s760
          %s762 = smul.addr %s761, 128
          %s763 = scalar_lea.hbm %s2, %s762
          %s764 = sshll.u32 %s752, 4
          %s765 = int_to_ptr.vmem [resolvable:$true] %s764
          %770 = dma.vmem_to_hbm [thread:$0]  %s765, 512, %s763, %s749, 256, 256, 16
        $region40: #{tpu_custom_call.1} parent=27 // pred_fallthru
          _
      $region28: #{tpu_custom_call.1} parent=5 // pred_fallthru
        _
      %p771 = scmp.le.s32.totalorder 2, %s15
      // Predicated region
      $region41: #{tpu_custom_call.1} parent=5 // pred_check
        %p772 = pneg %p771
      $region42: #{tpu_custom_call.1} parent=5 // pred_check_branch
        %774 = sbr.rel (%p772) target = $region44
      $region43: #{tpu_custom_call.1} parent=5 // pred_region
        %s775 = ssub.s32 %s15, 2
        // Predicated region
        $region45: #{tpu_custom_call.1} parent=43 // pred_check
          %p776 = pneg %p107
        $region46: #{tpu_custom_call.1} parent=43 // pred_check_branch
          %778 = sbr.rel (%p776) target = $region48
        $region47: #{tpu_custom_call.1} parent=43 // pred_region
          %s779 = sand.u32 %s92, 1
          %s780 = scalar_lea.sflag [#allocation4], %s779
          %s781 = sand.u32 %s92, 1
          %s782 = smul.addr %s781, 32
          %s783 = scalar_lea.vmem [#allocation7], %s782
          %784 = dma.done %s780, 512
        $region48: #{tpu_custom_call.1} parent=43 // pred_fallthru
          _
      $region44: #{tpu_custom_call.1} parent=5 // pred_fallthru
        _
    $region6: #{tpu_custom_call.1} parent=1 // loop_footer
      %s19 = sadd.s32 1, %s15
    $region7: #{tpu_custom_call.1} parent=1 // loop_footer_branch
      %14 = sbr.rel target = $region3
    $region8: #{tpu_custom_call.1} parent=1 // loop_exit
      _
    %785 = vsyncpa [#allocation3], 1
    %s786 = scalar_lea.sflag [#allocation3], 1
    %787 = vsyncpa %s786, 1
    %788 = vsyncpa [#allocation6], 1
    %789 = vsyncpa [#allocation4], 1
    %s790 = scalar_lea.sflag [#allocation4], 1
    %791 = vsyncpa %s790, 1

</llo_original>
